<compile_context>
chip_gen: v6e
topology: v6e:2x2x1
jax: 0.10.0
libtpu: 0.0.40
codegen_flags: <defaults>
</compile_context>

<pallas_src>
import jax
import jax.numpy as jnp
from jax.experimental import pallas as pl
from jax.experimental.pallas import tpu as pltpu


def _conv1x1_pad_bias_kernel(w_ref, bvec_ref, bscl_ref, x_ref, o_ref):
    """Fused 1x1 conv + bias + padding=1 border, single invocation (no grid).

    w_ref   : (C_out, C_in)            VMEM  weights
    bvec_ref: (C_out, 1)               VMEM  bias (lane-broadcast add on interior)
    bscl_ref: (C_out,)                 SMEM  bias (scalar splats for the border)
    x_ref   : (N, C_in, H*W)           VMEM  input, channels in sublanes, pixels in lanes
    o_ref   : (N, C_out, H+2, W+2)     VMEM  final padded NCHW output
    """
    N, C_in, HW = x_ref.shape
    _, C_out, Hp, Wp = o_ref.shape
    H, W = Hp - 2, Wp - 2

    # 1) Border fill: a zero-padded 1x1 conv's border equals the bias.  Fill the
    #    whole output with bias (interior overwritten below) using scalar->vector
    #    splats from SMEM — 8 tiny full-window stores, no relayout needed.
    for c in range(C_out):
        o_ref[:, c, :, :] = jnp.full((N, Hp, Wp), bscl_ref[c], dtype=o_ref.dtype)

    b = bvec_ref[...]  # (C_out, 1): broadcasts along lanes for the interior add.

    # 2) Interior: out[n] = W @ X[n] + bias.  HW=256 in lanes -> unmasked,
    #    lane-dense matmul result; bias add rides a free VPU slot.  N=2 is
    #    statically unrolled — no grid steps, no extra DMA issues.
    for n in range(N):
        acc = jnp.dot(w_ref[...], x_ref[n],
                      preferred_element_type=jnp.float32) + b      # (C_out, HW) f32
        vals = acc.reshape(C_out, H, W).astype(o_ref.dtype)        # ~8 KiB VMEM relayout
        o_ref[n, :, pl.ds(1, H), pl.ds(1, W)] = vals               # interior store


@jax.jit
def conv2d_1x1_pad1(x_nchw, weight, bias):
    """1x1 conv, stride=1, padding=1.

    x_nchw: (N, C_in, H, W), weight: (C_out, C_in, 1, 1), bias: (C_out,)
    returns (N, C_out, H+2, W+2) in NCHW — produced entirely by one Pallas call.
    """
    N, C_in, H, W = x_nchw.shape
    C_out = weight.shape[0]
    HW = H * W
    Hp, Wp = H + 2, W + 2

    x_mat = x_nchw.reshape(N, C_in, HW)      # pixels in lanes (as in reviewed version)
    w_mat = weight.reshape(C_out, C_in)      # (8, 23), resident in VMEM
    b_vec = bias.reshape(C_out, 1)           # for the interior lane-broadcast add
    b_scl = bias                             # (C_out,) scalars for the SMEM border fill

    flops = 2 * N * C_out * C_in * H * W
    bytes_accessed = 4 * (x_mat.size + w_mat.size + b_vec.size + b_scl.size
                          + N * C_out * Hp * Wp)

    return pl.pallas_call(
        _conv1x1_pad_bias_kernel,
        out_shape=jax.ShapeDtypeStruct((N, C_out, Hp, Wp), x_nchw.dtype),
        in_specs=[
            pl.BlockSpec(memory_space=pltpu.MemorySpace.VMEM),   # weights
            pl.BlockSpec(memory_space=pltpu.MemorySpace.VMEM),   # bias (C_out, 1)
            pl.BlockSpec(memory_space=pltpu.MemorySpace.SMEM),   # bias scalars
            pl.BlockSpec(memory_space=pltpu.MemorySpace.VMEM),   # x
        ],
        out_specs=pl.BlockSpec(memory_space=pltpu.MemorySpace.VMEM),
        cost_estimate=pl.CostEstimate(
            flops=flops, transcendentals=0, bytes_accessed=bytes_accessed),
    )(w_mat, b_vec, b_scl, x_mat)


if __name__ == "__main__":
    key = jax.random.PRNGKey(0)
    k_x, k_w, k_b = jax.random.split(key, 3)

    N, C_in, H, W = 2, 3 + 4 * 5, 16, 16   # C_in = 23, as in the module
    C_out = 8

    x = jax.random.normal(k_x, (N, C_in, H, W), dtype=jnp.float32)

    # Deterministic parameter init (PyTorch-style uniform bound for Conv2d)
    fan_in = C_in * 1 * 1
    bound = 1.0 / (fan_in ** 0.5)
    weight = jax.random.uniform(k_w, (C_out, C_in, 1, 1),
                                minval=-bound, maxval=bound, dtype=jnp.float32)
    bias = jax.random.uniform(k_b, (C_out,),
                              minval=-bound, maxval=bound, dtype=jnp.float32)

    out = conv2d_1x1_pad1(x, weight, bias)
    out = jax.block_until_ready(out)

    assert out.shape == (N, C_out, H + 2, W + 2), out.shape

    # Cross-check against plain JAX conv (lax.conv_general_dilated)
    ref = jax.lax.conv_general_dilated(
        x, weight, window_strides=(1, 1), padding=((1, 1), (1, 1)),
        dimension_numbers=("NCHW", "OIHW", "NCHW"),
    ) + bias.reshape(1, C_out, 1, 1)
    assert jnp.allclose(out, ref, atol=1e-5, rtol=1e-5)

    print("KERNEL_OK")
</pallas_src>

<mosaic_0001>
module attributes {stable_mosaic.version = 11 : i64} {
  func.func @_conv1x1_pad_bias_kernel(%arg0: memref<8x23xf32, #tpu.memory_space<vmem>>, %arg1: memref<8x1xf32, #tpu.memory_space<vmem>>, %arg2: memref<8xf32, #tpu.memory_space<smem>>, %arg3: memref<2x23x256xf32, #tpu.memory_space<vmem>>, %arg4: memref<2x8x18x18xf32, #tpu.memory_space<vmem>>) attributes {dimension_semantics = [], scalar_prefetch = 0 : i64, scratch_operands = 0 : i64, tpu.core_type = #tpu.core_type<tc>} {
    %c0 = arith.constant 0 : index
    %0 = memref.load %arg2[%c0] : memref<8xf32, #tpu.memory_space<smem>>
    %1 = vector.broadcast %0 : f32 to vector<2x18x18xf32>
    %c0_0 = arith.constant 0 : index
    %c0_1 = arith.constant 0 : index
    %c0_2 = arith.constant 0 : index
    %c0_3 = arith.constant 0 : index
    %2 = vector.load %arg4[%c0_0, %c0_1, %c0_2, %c0_3] : memref<2x8x18x18xf32, #tpu.memory_space<vmem>>, vector<2x1x18x18xf32>
    %3 = vector.shape_cast %2 : vector<2x1x18x18xf32> to vector<2x18x18xf32>
    %4 = vector.shape_cast %1 : vector<2x18x18xf32> to vector<2x1x18x18xf32>
    tpu.vector_store %arg4[%c0_0, %c0_1, %c0_2, %c0_3], %4 {strides = array<i32>} : memref<2x8x18x18xf32, #tpu.memory_space<vmem>>, vector<2x1x18x18xf32>,
    %c1 = arith.constant 1 : index
    %5 = memref.load %arg2[%c1] : memref<8xf32, #tpu.memory_space<smem>>
    %6 = vector.broadcast %5 : f32 to vector<2x18x18xf32>
    %c0_4 = arith.constant 0 : index
    %c1_5 = arith.constant 1 : index
    %c0_6 = arith.constant 0 : index
    %c0_7 = arith.constant 0 : index
    %7 = vector.load %arg4[%c0_4, %c1_5, %c0_6, %c0_7] : memref<2x8x18x18xf32, #tpu.memory_space<vmem>>, vector<2x1x18x18xf32>
    %8 = vector.shape_cast %7 : vector<2x1x18x18xf32> to vector<2x18x18xf32>
    %9 = vector.shape_cast %6 : vector<2x18x18xf32> to vector<2x1x18x18xf32>
    tpu.vector_store %arg4[%c0_4, %c1_5, %c0_6, %c0_7], %9 {strides = array<i32>} : memref<2x8x18x18xf32, #tpu.memory_space<vmem>>, vector<2x1x18x18xf32>,
    %c2 = arith.constant 2 : index
    %10 = memref.load %arg2[%c2] : memref<8xf32, #tpu.memory_space<smem>>
    %11 = vector.broadcast %10 : f32 to vector<2x18x18xf32>
    %c0_8 = arith.constant 0 : index
    %c2_9 = arith.constant 2 : index
    %c0_10 = arith.constant 0 : index
    %c0_11 = arith.constant 0 : index
    %12 = vector.load %arg4[%c0_8, %c2_9, %c0_10, %c0_11] : memref<2x8x18x18xf32, #tpu.memory_space<vmem>>, vector<2x1x18x18xf32>
    %13 = vector.shape_cast %12 : vector<2x1x18x18xf32> to vector<2x18x18xf32>
    %14 = vector.shape_cast %11 : vector<2x18x18xf32> to vector<2x1x18x18xf32>
    tpu.vector_store %arg4[%c0_8, %c2_9, %c0_10, %c0_11], %14 {strides = array<i32>} : memref<2x8x18x18xf32, #tpu.memory_space<vmem>>, vector<2x1x18x18xf32>,
    %c3 = arith.constant 3 : index
    %15 = memref.load %arg2[%c3] : memref<8xf32, #tpu.memory_space<smem>>
    %16 = vector.broadcast %15 : f32 to vector<2x18x18xf32>
    %c0_12 = arith.constant 0 : index
    %c3_13 = arith.constant 3 : index
    %c0_14 = arith.constant 0 : index
    %c0_15 = arith.constant 0 : index
    %17 = vector.load %arg4[%c0_12, %c3_13, %c0_14, %c0_15] : memref<2x8x18x18xf32, #tpu.memory_space<vmem>>, vector<2x1x18x18xf32>
    %18 = vector.shape_cast %17 : vector<2x1x18x18xf32> to vector<2x18x18xf32>
    %19 = vector.shape_cast %16 : vector<2x18x18xf32> to vector<2x1x18x18xf32>
    tpu.vector_store %arg4[%c0_12, %c3_13, %c0_14, %c0_15], %19 {strides = array<i32>} : memref<2x8x18x18xf32, #tpu.memory_space<vmem>>, vector<2x1x18x18xf32>,
    %c4 = arith.constant 4 : index
    %20 = memref.load %arg2[%c4] : memref<8xf32, #tpu.memory_space<smem>>
    %21 = vector.broadcast %20 : f32 to vector<2x18x18xf32>
    %c0_16 = arith.constant 0 : index
    %c4_17 = arith.constant 4 : index
    %c0_18 = arith.constant 0 : index
    %c0_19 = arith.constant 0 : index
    %22 = vector.load %arg4[%c0_16, %c4_17, %c0_18, %c0_19] : memref<2x8x18x18xf32, #tpu.memory_space<vmem>>, vector<2x1x18x18xf32>
    %23 = vector.shape_cast %22 : vector<2x1x18x18xf32> to vector<2x18x18xf32>
    %24 = vector.shape_cast %21 : vector<2x18x18xf32> to vector<2x1x18x18xf32>
    tpu.vector_store %arg4[%c0_16, %c4_17, %c0_18, %c0_19], %24 {strides = array<i32>} : memref<2x8x18x18xf32, #tpu.memory_space<vmem>>, vector<2x1x18x18xf32>,
    %c5 = arith.constant 5 : index
    %25 = memref.load %arg2[%c5] : memref<8xf32, #tpu.memory_space<smem>>
    %26 = vector.broadcast %25 : f32 to vector<2x18x18xf32>
    %c0_20 = arith.constant 0 : index
    %c5_21 = arith.constant 5 : index
    %c0_22 = arith.constant 0 : index
    %c0_23 = arith.constant 0 : index
    %27 = vector.load %arg4[%c0_20, %c5_21, %c0_22, %c0_23] : memref<2x8x18x18xf32, #tpu.memory_space<vmem>>, vector<2x1x18x18xf32>
    %28 = vector.shape_cast %27 : vector<2x1x18x18xf32> to vector<2x18x18xf32>
    %29 = vector.shape_cast %26 : vector<2x18x18xf32> to vector<2x1x18x18xf32>
    tpu.vector_store %arg4[%c0_20, %c5_21, %c0_22, %c0_23], %29 {strides = array<i32>} : memref<2x8x18x18xf32, #tpu.memory_space<vmem>>, vector<2x1x18x18xf32>,
    %c6 = arith.constant 6 : index
    %30 = memref.load %arg2[%c6] : memref<8xf32, #tpu.memory_space<smem>>
    %31 = vector.broadcast %30 : f32 to vector<2x18x18xf32>
    %c0_24 = arith.constant 0 : index
    %c6_25 = arith.constant 6 : index
    %c0_26 = arith.constant 0 : index
    %c0_27 = arith.constant 0 : index
    %32 = vector.load %arg4[%c0_24, %c6_25, %c0_26, %c0_27] : memref<2x8x18x18xf32, #tpu.memory_space<vmem>>, vector<2x1x18x18xf32>
    %33 = vector.shape_cast %32 : vector<2x1x18x18xf32> to vector<2x18x18xf32>
    %34 = vector.shape_cast %31 : vector<2x18x18xf32> to vector<2x1x18x18xf32>
    tpu.vector_store %arg4[%c0_24, %c6_25, %c0_26, %c0_27], %34 {strides = array<i32>} : memref<2x8x18x18xf32, #tpu.memory_space<vmem>>, vector<2x1x18x18xf32>,
    %c7 = arith.constant 7 : index
    %35 = memref.load %arg2[%c7] : memref<8xf32, #tpu.memory_space<smem>>
    %36 = vector.broadcast %35 : f32 to vector<2x18x18xf32>
    %c0_28 = arith.constant 0 : index
    %c7_29 = arith.constant 7 : index
    %c0_30 = arith.constant 0 : index
    %c0_31 = arith.constant 0 : index
    %37 = vector.load %arg4[%c0_28, %c7_29, %c0_30, %c0_31] : memref<2x8x18x18xf32, #tpu.memory_space<vmem>>, vector<2x1x18x18xf32>
    %38 = vector.shape_cast %37 : vector<2x1x18x18xf32> to vector<2x18x18xf32>
    %39 = vector.shape_cast %36 : vector<2x18x18xf32> to vector<2x1x18x18xf32>
    tpu.vector_store %arg4[%c0_28, %c7_29, %c0_30, %c0_31], %39 {strides = array<i32>} : memref<2x8x18x18xf32, #tpu.memory_space<vmem>>, vector<2x1x18x18xf32>,
    %c0_32 = arith.constant 0 : index
    %c0_33 = arith.constant 0 : index
    %40 = vector.load %arg1[%c0_32, %c0_33] : memref<8x1xf32, #tpu.memory_space<vmem>>, vector<8x1xf32>
    %c0_34 = arith.constant 0 : index
    %c0_35 = arith.constant 0 : index
    %41 = vector.load %arg0[%c0_34, %c0_35] : memref<8x23xf32, #tpu.memory_space<vmem>>, vector<8x23xf32>
    %c0_36 = arith.constant 0 : index
    %c0_37 = arith.constant 0 : index
    %c0_38 = arith.constant 0 : index
    %42 = vector.load %arg3[%c0_36, %c0_37, %c0_38] : memref<2x23x256xf32, #tpu.memory_space<vmem>>, vector<1x23x256xf32>
    %43 = vector.shape_cast %42 : vector<1x23x256xf32> to vector<23x256xf32>
    %cst = arith.constant dense<0.000000e+00> : vector<8x256xf32>
    %44 = tpu.matmul %41, %43, %cst {dimension_numbers = #tpu.dot_dimension_numbers<[1], [0], [0], [1], [0, 0, 1, 1], [], []>} : vector<8x23xf32>, vector<23x256xf32>, vector<8x256xf32> -> vector<8x256xf32>
    %45 = vector.broadcast %40 : vector<8x1xf32> to vector<8x256xf32>
    %46 = arith.addf %44, %45 : vector<8x256xf32>
    %47 = vector.shape_cast %46 : vector<8x256xf32> to vector<8x16x16xf32>
    %c0_39 = arith.constant 0 : index
    %c0_40 = arith.constant 0 : index
    %c1_41 = arith.constant 1 : index
    %c1_42 = arith.constant 1 : index
    %48 = vector.load %arg4[%c0_39, %c0_40, %c1_41, %c1_42] : memref<2x8x18x18xf32, #tpu.memory_space<vmem>>, vector<1x8x16x16xf32>
    %49 = vector.shape_cast %48 : vector<1x8x16x16xf32> to vector<8x16x16xf32>
    %50 = vector.shape_cast %47 : vector<8x16x16xf32> to vector<1x8x16x16xf32>
    tpu.vector_store %arg4[%c0_39, %c0_40, %c1_41, %c1_42], %50 {strides = array<i32>} : memref<2x8x18x18xf32, #tpu.memory_space<vmem>>, vector<1x8x16x16xf32>,
    %c0_43 = arith.constant 0 : index
    %c0_44 = arith.constant 0 : index
    %51 = vector.load %arg0[%c0_43, %c0_44] : memref<8x23xf32, #tpu.memory_space<vmem>>, vector<8x23xf32>
    %c1_45 = arith.constant 1 : index
    %c0_46 = arith.constant 0 : index
    %c0_47 = arith.constant 0 : index
    %52 = vector.load %arg3[%c1_45, %c0_46, %c0_47] : memref<2x23x256xf32, #tpu.memory_space<vmem>>, vector<1x23x256xf32>
    %53 = vector.shape_cast %52 : vector<1x23x256xf32> to vector<23x256xf32>
    %cst_48 = arith.constant dense<0.000000e+00> : vector<8x256xf32>
    %54 = tpu.matmul %51, %53, %cst_48 {dimension_numbers = #tpu.dot_dimension_numbers<[1], [0], [0], [1], [0, 0, 1, 1], [], []>} : vector<8x23xf32>, vector<23x256xf32>, vector<8x256xf32> -> vector<8x256xf32>
    %55 = vector.broadcast %40 : vector<8x1xf32> to vector<8x256xf32>
    %56 = arith.addf %54, %55 : vector<8x256xf32>
    %57 = vector.shape_cast %56 : vector<8x256xf32> to vector<8x16x16xf32>
    %c1_49 = arith.constant 1 : index
    %c0_50 = arith.constant 0 : index
    %c1_51 = arith.constant 1 : index
    %c1_52 = arith.constant 1 : index
    %58 = vector.load %arg4[%c1_49, %c0_50, %c1_51, %c1_52] : memref<2x8x18x18xf32, #tpu.memory_space<vmem>>, vector<1x8x16x16xf32>
    %59 = vector.shape_cast %58 : vector<1x8x16x16xf32> to vector<8x16x16xf32>
    %60 = vector.shape_cast %57 : vector<8x16x16xf32> to vector<1x8x16x16xf32>
    tpu.vector_store %arg4[%c1_49, %c0_50, %c1_51, %c1_52], %60 {strides = array<i32>} : memref<2x8x18x18xf32, #tpu.memory_space<vmem>>, vector<1x8x16x16xf32>,
    return
  }
}

</mosaic_0001>

<llo_original>
// kernel: conv2d_1x1_pad1.1
$region0: #{conv2d_1x1_pad1.1}
  #allocation0 [shape = 'u32[]', space=smem, size = 0x4, offset = 0x4, fixed_abs, tag = 'smem constant byte address 0x4 - core index']
  #allocation1 [shape = 'u32[144,128]{1,0:T(1,128)}', space=vmem, size = 0x12000, scoped, tag = 'internal scratch']
  %s0 = inlined_call_operand.vmem [shape: f32[8,23], index: 0, kind: input, shape index: {}]
  %s1 = inlined_call_operand.vmem [shape: f32[8,1], index: 1, kind: input, shape index: {}]
  %s2 = inlined_call_operand.vmem [shape: f32[8], index: 2, kind: input, shape index: {}]
  %s3 = inlined_call_operand.vmem [shape: f32[2,23,256], index: 3, kind: input, shape index: {}]
  %s4 = inlined_call_operand.vmem [shape: f32[2,8,18,18], index: 4, kind: output, shape index: {}]
  %s5 = sld [smem:[#allocation0]]
  $region30: #{conv2d_1x1_pad1.1} parent=0
    _
  %s7 = ssub.s32 1, %s5
  %s8 = scalar_select 0, %s7, %s5
  $region1: #{conv2d_1x1_pad1.1} parent=0
    #allocation2 [shape = 'u8[512]{0}', space=smem, size = 0x200, scoped, tag = 'input window, operand 2, single buffered']
    #allocation3 [shape = 's32[1]{0}', space=sflag, size = 0x4, scoped, tag = 'scoped memory for conv2d_1x1_pad1.1']
    %9 = vsyncpa [#allocation3], 0
    // Predicated region
    $region2: #{conv2d_1x1_pad1.1} parent=1 // pred_check
      _
    $region3: #{conv2d_1x1_pad1.1} parent=1 // pred_check_branch
      %11 = sbr.rel (0) target = $region5
    $region4: #{conv2d_1x1_pad1.1} parent=1 // pred_region
      _
    $region5: #{conv2d_1x1_pad1.1} parent=1 // pred_fallthru
      _
    // Predicated region
    $region6: #{conv2d_1x1_pad1.1} parent=1 // pred_check
      _
    $region7: #{conv2d_1x1_pad1.1} parent=1 // pred_check_branch
      %13 = sbr.rel (0) target = $region9
    $region8: #{conv2d_1x1_pad1.1} parent=1 // pred_region
      _
    $region9: #{conv2d_1x1_pad1.1} parent=1 // pred_fallthru
      _
    // Predicated region
    $region10: #{conv2d_1x1_pad1.1} parent=1 // pred_check
      _
    $region11: #{conv2d_1x1_pad1.1} parent=1 // pred_check_branch
      %15 = sbr.rel (0) target = $region13
    $region12: #{conv2d_1x1_pad1.1} parent=1 // pred_region
      %s17 = ssub.s32 16, 16
      %18 = vsyncadd [#allocation3], %s17
      %s20 = sshll.u32 %s2, 4
      %s21 = int_to_ptr.vmem [resolvable:$true] %s20
      %23 = dma.vmem_to_smem %s21, 16, [#allocation2], [#allocation3]
    $region13: #{conv2d_1x1_pad1.1} parent=1 // pred_fallthru
      _
    // Predicated region
    $region14: #{conv2d_1x1_pad1.1} parent=1 // pred_check
      _
    $region15: #{conv2d_1x1_pad1.1} parent=1 // pred_check_branch
      %25 = sbr.rel (0) target = $region17
    $region16: #{conv2d_1x1_pad1.1} parent=1 // pred_region
      _
    $region17: #{conv2d_1x1_pad1.1} parent=1 // pred_fallthru
      _
    // Predicated region
    $region18: #{conv2d_1x1_pad1.1} parent=1 // pred_check
      _
    $region19: #{conv2d_1x1_pad1.1} parent=1 // pred_check_branch
      %27 = sbr.rel (0) target = $region21
    $region20: #{conv2d_1x1_pad1.1} parent=1 // pred_region
      %28 = dma.done [#allocation3], 16
    $region21: #{conv2d_1x1_pad1.1} parent=1 // pred_fallthru
      _
    %29 = sfence
    %s30 = sld [smem:[#allocation2]]
    %v31 = vstv %s30
    %vm32 = vcmask 146432
    %33 = vst.msk [vmem:[%s4] sm:$0xff] %vm32, %v31
    %34 = vst.msk [vmem:[%s4 + $0x8] sm:$0xff] %vm32, %v31
    %vm35 = vcmask 140288
    %36 = vst.msk [vmem:[%s4 + $0x10] sm:$0x3] %vm35, %v31
    %37 = vst.msk [vmem:[%s4 + $0xc0] sm:$0xff] %vm32, %v31
    %38 = vst.msk [vmem:[%s4 + $0xc8] sm:$0xff] %vm32, %v31
    %39 = vst.msk [vmem:[%s4 + $0xd0] sm:$0x3] %vm35, %v31
    %s40 = sld [smem:[#allocation2 + $0x1]]
    %v41 = vstv %s40
    %s42 = scalar_lea.vmem %s4, 24
    %43 = vst.msk [vmem:[%s42] sm:$0xff] %vm32, %v41
    %44 = vst.msk [vmem:[%s42 + $0x8] sm:$0xff] %vm32, %v41
    %45 = vst.msk [vmem:[%s42 + $0x10] sm:$0x3] %vm35, %v41
    %46 = vst.msk [vmem:[%s42 + $0xc0] sm:$0xff] %vm32, %v41
    %47 = vst.msk [vmem:[%s42 + $0xc8] sm:$0xff] %vm32, %v41
    %48 = vst.msk [vmem:[%s42 + $0xd0] sm:$0x3] %vm35, %v41
    %s49 = sld [smem:[#allocation2 + $0x2]]
    %v50 = vstv %s49
    %s51 = scalar_lea.vmem %s4, 48
    %52 = vst.msk [vmem:[%s51] sm:$0xff] %vm32, %v50
    %53 = vst.msk [vmem:[%s51 + $0x8] sm:$0xff] %vm32, %v50
    %54 = vst.msk [vmem:[%s51 + $0x10] sm:$0x3] %vm35, %v50
    %55 = vst.msk [vmem:[%s51 + $0xc0] sm:$0xff] %vm32, %v50
    %56 = vst.msk [vmem:[%s51 + $0xc8] sm:$0xff] %vm32, %v50
    %57 = vst.msk [vmem:[%s51 + $0xd0] sm:$0x3] %vm35, %v50
    %s58 = sld [smem:[#allocation2 + $0x3]]
    %v59 = vstv %s58
    %s60 = scalar_lea.vmem %s4, 72
    %61 = vst.msk [vmem:[%s60] sm:$0xff] %vm32, %v59
    %62 = vst.msk [vmem:[%s60 + $0x8] sm:$0xff] %vm32, %v59
    %63 = vst.msk [vmem:[%s60 + $0x10] sm:$0x3] %vm35, %v59
    %64 = vst.msk [vmem:[%s60 + $0xc0] sm:$0xff] %vm32, %v59
    %65 = vst.msk [vmem:[%s60 + $0xc8] sm:$0xff] %vm32, %v59
    %66 = vst.msk [vmem:[%s60 + $0xd0] sm:$0x3] %vm35, %v59
    %s67 = sld [smem:[#allocation2 + $0x4]]
    %v68 = vstv %s67
    %s69 = scalar_lea.vmem %s4, 96
    %70 = vst.msk [vmem:[%s69] sm:$0xff] %vm32, %v68
    %71 = vst.msk [vmem:[%s69 + $0x8] sm:$0xff] %vm32, %v68
    %72 = vst.msk [vmem:[%s69 + $0x10] sm:$0x3] %vm35, %v68
    %73 = vst.msk [vmem:[%s69 + $0xc0] sm:$0xff] %vm32, %v68
    %74 = vst.msk [vmem:[%s69 + $0xc8] sm:$0xff] %vm32, %v68
    %75 = vst.msk [vmem:[%s69 + $0xd0] sm:$0x3] %vm35, %v68
    %s76 = sld [smem:[#allocation2 + $0x5]]
    %v77 = vstv %s76
    %s78 = scalar_lea.vmem %s4, 120
    %79 = vst.msk [vmem:[%s78] sm:$0xff] %vm32, %v77
    %80 = vst.msk [vmem:[%s78 + $0x8] sm:$0xff] %vm32, %v77
    %81 = vst.msk [vmem:[%s78 + $0x10] sm:$0x3] %vm35, %v77
    %82 = vst.msk [vmem:[%s78 + $0xc0] sm:$0xff] %vm32, %v77
    %83 = vst.msk [vmem:[%s78 + $0xc8] sm:$0xff] %vm32, %v77
    %84 = vst.msk [vmem:[%s78 + $0xd0] sm:$0x3] %vm35, %v77
    %s85 = sld [smem:[#allocation2 + $0x6]]
    %v86 = vstv %s85
    %s87 = scalar_lea.vmem %s4, 144
    %88 = vst.msk [vmem:[%s87] sm:$0xff] %vm32, %v86
    %89 = vst.msk [vmem:[%s87 + $0x8] sm:$0xff] %vm32, %v86
    %90 = vst.msk [vmem:[%s87 + $0x10] sm:$0x3] %vm35, %v86
    %91 = vst.msk [vmem:[%s87 + $0xc0] sm:$0xff] %vm32, %v86
    %92 = vst.msk [vmem:[%s87 + $0xc8] sm:$0xff] %vm32, %v86
    %93 = vst.msk [vmem:[%s87 + $0xd0] sm:$0x3] %vm35, %v86
    %s94 = sld [smem:[#allocation2 + $0x7]]
    %v95 = vstv %s94
    %s96 = scalar_lea.vmem %s4, 168
    %97 = vst.msk [vmem:[%s96] sm:$0xff] %vm32, %v95
    %98 = vst.msk [vmem:[%s96 + $0x8] sm:$0xff] %vm32, %v95
    %99 = vst.msk [vmem:[%s96 + $0x10] sm:$0x3] %vm35, %v95
    %100 = vst.msk [vmem:[%s96 + $0xc0] sm:$0xff] %vm32, %v95
    %101 = vst.msk [vmem:[%s96 + $0xc8] sm:$0xff] %vm32, %v95
    %102 = vst.msk [vmem:[%s96 + $0xd0] sm:$0x3] %vm35, %v95
    %v103 = vld [vmem:[%s1] sm:$0xff]
    %v104 = vld [vmem:[%s0] sm:$0xff]
    %v105 = vld [vmem:[%s3] sm:$0xff]
    %v106 = vld [vmem:[%s3 + $0x8] sm:$0xff]
    %v107 = vld [vmem:[%s3 + $0x10] sm:$0xff]
    %v108 = vld [vmem:[%s3 + $0x18] sm:$0xff]
    %v109 = vld [vmem:[%s3 + $0x20] sm:$0x7f]
    %v110 = vld [vmem:[%s3 + $0x28] sm:$0x7f]
    %112 = vset.pattern.permute.xlu0 0
    %113 = vperm.xlu0 %112, %v103
    %v114 = vpop.permute.xlu0 %113
    %vm116 = vcmask 187392
    %v118 = vsel %vm116, %v104, 0
    %vm120 = vcmask 1046528
    %v122 = vsel %vm120, %v109, 0
    %v125 = vsel %vm120, %v110, 0
    %127 = vmatprep.subr.mxu0 0.0
    %128 = vmatpush1.msra.mxu0 0.0
    %129 = vmatprep.subr.mxu0 0.0
    %130 = vmatpush1.msra.mxu0 0.0
    %131 = vmatprep.subr.mxu0 0.0
    %132 = vmatpush1.msra.mxu0 0.0
    %133 = vmatprep.subr.mxu0 0.0
    %134 = vmatpush1.msra.mxu0 0.0
    %135 = vmatprep.subr.mxu0 0.0
    %136 = vmatpush1.msra.mxu0 0.0
    %137 = vmatprep.subr.mxu0 0.0
    %138 = vmatpush1.msra.mxu0 0.0
    %139 = vmatprep.subr.mxu0 0.0
    %140 = vmatpush1.msra.mxu0 0.0
    %141 = vmatprep.subr.mxu0 0.0
    %142 = vmatpush1.msra.mxu0 0.0
    %143 = vmatprep.subr.mxu0 0.0
    %144 = vmatpush1.msra.mxu0 0.0
    %145 = vmatprep.subr.mxu0 0.0
    %146 = vmatpush1.msra.mxu0 0.0
    %147 = vmatprep.subr.mxu0 0.0
    %148 = vmatpush1.msra.mxu0 0.0
    %149 = vmatprep.subr.mxu0 0.0
    %150 = vmatpush1.msra.mxu0 0.0
    %151 = vmatprep.subr.mxu0 0.0
    %152 = vmatpush1.msra.mxu0 0.0
    %153 = vmatprep.subr.mxu0 %v125
    %154 = vmatpush1.msra.mxu0 %v122
    %155 = vmatprep.subr.mxu0 %v108
    %156 = vmatpush1.msra.mxu0 %v107
    %157 = vmatprep.subr.mxu0 %v106
    %158 = vmatpush1.msra.mxu0 %v105
    %159 = vmatprep.subr.mxu0 0.0
    %160 = vmatpush2.msra.mxu0 0.0
    %161 = vmatprep.subr.mxu0 0.0
    %162 = vmatpush2.msra.mxu0 0.0
    %163 = vmatprep.subr.mxu0 0.0
    %164 = vmatpush2.msra.mxu0 0.0
    %165 = vmatprep.subr.mxu0 0.0
    %166 = vmatpush2.msra.mxu0 0.0
    %167 = vmatprep.subr.mxu0 0.0
    %168 = vmatpush2.msra.mxu0 0.0
    %169 = vmatprep.subr.mxu0 0.0
    %170 = vmatpush2.msra.mxu0 0.0
    %171 = vmatprep.subr.mxu0 0.0
    %172 = vmatpush2.msra.mxu0 0.0
    %173 = vmatprep.subr.mxu0 0.0
    %174 = vmatpush2.msra.mxu0 0.0
    %175 = vmatprep.subr.mxu0 0.0
    %176 = vmatpush2.msra.mxu0 0.0
    %177 = vmatprep.subr.mxu0 0.0
    %178 = vmatpush2.msra.mxu0 0.0
    %179 = vmatprep.subr.mxu0 0.0
    %180 = vmatpush2.msra.mxu0 0.0
    %181 = vmatprep.subr.mxu0 0.0
    %182 = vmatpush2.msra.mxu0 0.0
    %183 = vmatprep.subr.mxu0 0.0
    %184 = vmatpush2.msra.mxu0 0.0
    %185 = vmatprep.subr.mxu0 0.0
    %186 = vmatpush2.msra.mxu0 0.0
    %187 = vmatprep.subr.mxu0 0.0
    %188 = vmatpush2.msra.mxu0 0.0
    %189 = vmatprep.subr.mxu0 0.0
    %190 = vmatpush2.msra.mxu0 0.0
    %191 = vmatprep.mubr.f32.mxu0 0.0
    %192 = vmatmul.mubr.f32.gmra.mxu0 %v118
    %v193 = vpop.f32.mrf.mxu0
    %v194 = vadd.f32 %v114, %v193
    %v195 = vpop.f32.mrf.mxu0
    %v196 = vadd.f32 %v114, %v195
    %197 = vdwg.mxu0
    %199 = vrot.lane.b32.xlu0 %v194, 112
    %v200 = vpop.permute.xlu0 %199
    %202 = vrot.lane.b32.xlu0 %v194, 96
    %v203 = vpop.permute.xlu0 %202
    %205 = vrot.lane.b32.xlu0 %v194, 80
    %v206 = vpop.permute.xlu0 %205
    %208 = vrot.lane.b32.xlu0 %v194, 64
    %v209 = vpop.permute.xlu0 %208
    %211 = vrot.lane.b32.xlu0 %v194, 48
    %v212 = vpop.permute.xlu0 %211
    %214 = vrot.lane.b32.xlu0 %v194, 32
    %v215 = vpop.permute.xlu0 %214
    %217 = vrot.lane.b32.xlu0 %v194, 16
    %v218 = vpop.permute.xlu0 %217
    %221 = vrot.lane.b32.xlu0 %v196, 112
    %v222 = vpop.permute.xlu0 %221
    %224 = vrot.lane.b32.xlu0 %v196, 96
    %v225 = vpop.permute.xlu0 %224
    %227 = vrot.lane.b32.xlu0 %v196, 80
    %v228 = vpop.permute.xlu0 %227
    %230 = vrot.lane.b32.xlu0 %v196, 64
    %v231 = vpop.permute.xlu0 %230
    %233 = vrot.lane.b32.xlu0 %v196, 48
    %v234 = vpop.permute.xlu0 %233
    %236 = vrot.lane.b32.xlu0 %v196, 32
    %v237 = vpop.permute.xlu0 %236
    %239 = vrot.lane.b32.xlu0 %v196, 16
    %v240 = vpop.permute.xlu0 %239
    %v242 = vcombine.low %v194, %v203
    %v243 = vcombine.high %v194, %v203
    %v245 = vunpack.c.l.s4 1983009808
    %v246 = vunpack.c.0.s8 %v245
    %v247 = vlaneseq
    %v248 = vshrl.u32 %v247, 7
    %v249 = vsub.s32 %v246, %v248
    %v250 = vrot.slane %v242, %v249
    %v252 = vunpack.c.l.s4 1983009808
    %v253 = vunpack.c.0.s8 %v252
    %v254 = vlaneseq
    %v255 = vshrl.u32 %v254, 7
    %v256 = vsub.s32 %v253, %v255
    %v257 = vrot.slane %v243, %v256
    %v258 = vcombine.low %v200, %v206
    %v259 = vcombine.high %v200, %v206
    %v261 = vunpack.c.l.s4 1983009808
    %v262 = vunpack.c.0.s8 %v261
    %v263 = vlaneseq
    %v264 = vshrl.u32 %v263, 7
    %v265 = vsub.s32 %v262, %v264
    %v266 = vrot.slane %v258, %v265
    %v268 = vunpack.c.l.s4 1983009808
    %v269 = vunpack.c.0.s8 %v268
    %v270 = vlaneseq
    %v271 = vshrl.u32 %v270, 7
    %v272 = vsub.s32 %v269, %v271
    %v273 = vrot.slane %v259, %v272
    %v274 = vcombine.low %v209, %v215
    %v275 = vcombine.high %v209, %v215
    %v277 = vunpack.c.l.s4 1983009808
    %v278 = vunpack.c.0.s8 %v277
    %v279 = vlaneseq
    %v280 = vshrl.u32 %v279, 7
    %v281 = vsub.s32 %v278, %v280
    %v282 = vrot.slane %v274, %v281
    %v284 = vunpack.c.l.s4 1983009808
    %v285 = vunpack.c.0.s8 %v284
    %v286 = vlaneseq
    %v287 = vshrl.u32 %v286, 7
    %v288 = vsub.s32 %v285, %v287
    %v289 = vrot.slane %v275, %v288
    %v290 = vcombine.low %v212, %v218
    %v291 = vcombine.high %v212, %v218
    %v293 = vunpack.c.l.s4 1983009808
    %v294 = vunpack.c.0.s8 %v293
    %v295 = vlaneseq
    %v296 = vshrl.u32 %v295, 7
    %v297 = vsub.s32 %v294, %v296
    %v298 = vrot.slane %v290, %v297
    %v300 = vunpack.c.l.s4 1983009808
    %v301 = vunpack.c.0.s8 %v300
    %v302 = vlaneseq
    %v303 = vshrl.u32 %v302, 7
    %v304 = vsub.s32 %v301, %v303
    %v305 = vrot.slane %v291, %v304
    %v306 = vcombine.low %v250, %v266
    %v307 = vcombine.high %v250, %v266
    %v309 = vunpack.c.l.s4 1934713408
    %v310 = vunpack.c.0.s8 %v309
    %v311 = vlaneseq
    %v312 = vshrl.u32 %v311, 7
    %v313 = vsub.s32 %v310, %v312
    %v314 = vrot.slane %v306, %v313
    %v316 = vunpack.c.l.s4 1934713408
    %v317 = vunpack.c.0.s8 %v316
    %v318 = vlaneseq
    %v319 = vshrl.u32 %v318, 7
    %v320 = vsub.s32 %v317, %v319
    %v321 = vrot.slane %v307, %v320
    %v322 = vcombine.low %v257, %v273
    %v323 = vcombine.high %v257, %v273
    %v325 = vunpack.c.l.s4 1934713408
    %v326 = vunpack.c.0.s8 %v325
    %v327 = vlaneseq
    %v328 = vshrl.u32 %v327, 7
    %v329 = vsub.s32 %v326, %v328
    %v330 = vrot.slane %v322, %v329
    %v332 = vunpack.c.l.s4 1934713408
    %v333 = vunpack.c.0.s8 %v332
    %v334 = vlaneseq
    %v335 = vshrl.u32 %v334, 7
    %v336 = vsub.s32 %v333, %v335
    %v337 = vrot.slane %v323, %v336
    %v338 = vcombine.low %v282, %v298
    %v339 = vcombine.high %v282, %v298
    %v341 = vunpack.c.l.s4 1934713408
    %v342 = vunpack.c.0.s8 %v341
    %v343 = vlaneseq
    %v344 = vshrl.u32 %v343, 7
    %v345 = vsub.s32 %v342, %v344
    %v346 = vrot.slane %v338, %v345
    %v348 = vunpack.c.l.s4 1934713408
    %v349 = vunpack.c.0.s8 %v348
    %v350 = vlaneseq
    %v351 = vshrl.u32 %v350, 7
    %v352 = vsub.s32 %v349, %v351
    %v353 = vrot.slane %v339, %v352
    %v354 = vcombine.low %v289, %v305
    %v355 = vcombine.high %v289, %v305
    %v357 = vunpack.c.l.s4 1934713408
    %v358 = vunpack.c.0.s8 %v357
    %v359 = vlaneseq
    %v360 = vshrl.u32 %v359, 7
    %v361 = vsub.s32 %v358, %v360
    %v362 = vrot.slane %v354, %v361
    %v364 = vunpack.c.l.s4 1934713408
    %v365 = vunpack.c.0.s8 %v364
    %v366 = vlaneseq
    %v367 = vshrl.u32 %v366, 7
    %v368 = vsub.s32 %v365, %v367
    %v369 = vrot.slane %v355, %v368
    %v370 = vcombine.low %v314, %v346
    %v371 = vcombine.high %v314, %v346
    %v372 = vcombine.low %v321, %v353
    %v373 = vcombine.high %v321, %v353
    %v374 = vcombine.low %v330, %v362
    %v375 = vcombine.high %v330, %v362
    %v376 = vcombine.low %v337, %v369
    %v377 = vcombine.high %v337, %v369
    %v378 = vcombine.low %v196, %v225
    %v379 = vcombine.high %v196, %v225
    %v381 = vunpack.c.l.s4 1983009808
    %v382 = vunpack.c.0.s8 %v381
    %v383 = vlaneseq
    %v384 = vshrl.u32 %v383, 7
    %v385 = vsub.s32 %v382, %v384
    %v386 = vrot.slane %v378, %v385
    %v388 = vunpack.c.l.s4 1983009808
    %v389 = vunpack.c.0.s8 %v388
    %v390 = vlaneseq
    %v391 = vshrl.u32 %v390, 7
    %v392 = vsub.s32 %v389, %v391
    %v393 = vrot.slane %v379, %v392
    %v394 = vcombine.low %v222, %v228
    %v395 = vcombine.high %v222, %v228
    %v397 = vunpack.c.l.s4 1983009808
    %v398 = vunpack.c.0.s8 %v397
    %v399 = vlaneseq
    %v400 = vshrl.u32 %v399, 7
    %v401 = vsub.s32 %v398, %v400
    %v402 = vrot.slane %v394, %v401
    %v404 = vunpack.c.l.s4 1983009808
    %v405 = vunpack.c.0.s8 %v404
    %v406 = vlaneseq
    %v407 = vshrl.u32 %v406, 7
    %v408 = vsub.s32 %v405, %v407
    %v409 = vrot.slane %v395, %v408
    %v410 = vcombine.low %v231, %v237
    %v411 = vcombine.high %v231, %v237
    %v413 = vunpack.c.l.s4 1983009808
    %v414 = vunpack.c.0.s8 %v413
    %v415 = vlaneseq
    %v416 = vshrl.u32 %v415, 7
    %v417 = vsub.s32 %v414, %v416
    %v418 = vrot.slane %v410, %v417
    %v420 = vunpack.c.l.s4 1983009808
    %v421 = vunpack.c.0.s8 %v420
    %v422 = vlaneseq
    %v423 = vshrl.u32 %v422, 7
    %v424 = vsub.s32 %v421, %v423
    %v425 = vrot.slane %v411, %v424
    %v426 = vcombine.low %v234, %v240
    %v427 = vcombine.high %v234, %v240
    %v429 = vunpack.c.l.s4 1983009808
    %v430 = vunpack.c.0.s8 %v429
    %v431 = vlaneseq
    %v432 = vshrl.u32 %v431, 7
    %v433 = vsub.s32 %v430, %v432
    %v434 = vrot.slane %v426, %v433
    %v436 = vunpack.c.l.s4 1983009808
    %v437 = vunpack.c.0.s8 %v436
    %v438 = vlaneseq
    %v439 = vshrl.u32 %v438, 7
    %v440 = vsub.s32 %v437, %v439
    %v441 = vrot.slane %v427, %v440
    %v442 = vcombine.low %v386, %v402
    %v443 = vcombine.high %v386, %v402
    %v445 = vunpack.c.l.s4 1934713408
    %v446 = vunpack.c.0.s8 %v445
    %v447 = vlaneseq
    %v448 = vshrl.u32 %v447, 7
    %v449 = vsub.s32 %v446, %v448
    %v450 = vrot.slane %v442, %v449
    %v452 = vunpack.c.l.s4 1934713408
    %v453 = vunpack.c.0.s8 %v452
    %v454 = vlaneseq
    %v455 = vshrl.u32 %v454, 7
    %v456 = vsub.s32 %v453, %v455
    %v457 = vrot.slane %v443, %v456
    %v458 = vcombine.low %v393, %v409
    %v459 = vcombine.high %v393, %v409
    %v461 = vunpack.c.l.s4 1934713408
    %v462 = vunpack.c.0.s8 %v461
    %v463 = vlaneseq
    %v464 = vshrl.u32 %v463, 7
    %v465 = vsub.s32 %v462, %v464
    %v466 = vrot.slane %v458, %v465
    %v468 = vunpack.c.l.s4 1934713408
    %v469 = vunpack.c.0.s8 %v468
    %v470 = vlaneseq
    %v471 = vshrl.u32 %v470, 7
    %v472 = vsub.s32 %v469, %v471
    %v473 = vrot.slane %v459, %v472
    %v474 = vcombine.low %v418, %v434
    %v475 = vcombine.high %v418, %v434
    %v477 = vunpack.c.l.s4 1934713408
    %v478 = vunpack.c.0.s8 %v477
    %v479 = vlaneseq
    %v480 = vshrl.u32 %v479, 7
    %v481 = vsub.s32 %v478, %v480
    %v482 = vrot.slane %v474, %v481
    %v484 = vunpack.c.l.s4 1934713408
    %v485 = vunpack.c.0.s8 %v484
    %v486 = vlaneseq
    %v487 = vshrl.u32 %v486, 7
    %v488 = vsub.s32 %v485, %v487
    %v489 = vrot.slane %v475, %v488
    %v490 = vcombine.low %v425, %v441
    %v491 = vcombine.high %v425, %v441
    %v493 = vunpack.c.l.s4 1934713408
    %v494 = vunpack.c.0.s8 %v493
    %v495 = vlaneseq
    %v496 = vshrl.u32 %v495, 7
    %v497 = vsub.s32 %v494, %v496
    %v498 = vrot.slane %v490, %v497
    %v500 = vunpack.c.l.s4 1934713408
    %v501 = vunpack.c.0.s8 %v500
    %v502 = vlaneseq
    %v503 = vshrl.u32 %v502, 7
    %v504 = vsub.s32 %v501, %v503
    %v505 = vrot.slane %v491, %v504
    %v506 = vcombine.low %v450, %v482
    %v507 = vcombine.high %v450, %v482
    %v508 = vcombine.low %v457, %v489
    %v509 = vcombine.high %v457, %v489
    %v510 = vcombine.low %v466, %v498
    %v511 = vcombine.high %v466, %v498
    %v512 = vcombine.low %v473, %v505
    %v513 = vcombine.high %v473, %v505
    %530 = vrot.lane.b32.xlu0 %v370, 1
    %v531 = vpop.permute.xlu0 %530
    %532 = vrot.lane.b32.xlu0 %v506, 1
    %v533 = vpop.permute.xlu0 %532
    %534 = vrot.lane.b32.xlu0 %v371, 1
    %v535 = vpop.permute.xlu0 %534
    %536 = vrot.lane.b32.xlu0 %v507, 1
    %v537 = vpop.permute.xlu0 %536
    %538 = vrot.lane.b32.xlu0 %v372, 1
    %v539 = vpop.permute.xlu0 %538
    %540 = vrot.lane.b32.xlu0 %v508, 1
    %v541 = vpop.permute.xlu0 %540
    %542 = vrot.lane.b32.xlu0 %v373, 1
    %v543 = vpop.permute.xlu0 %542
    %544 = vrot.lane.b32.xlu0 %v509, 1
    %v545 = vpop.permute.xlu0 %544
    %546 = vrot.lane.b32.xlu0 %v374, 1
    %v547 = vpop.permute.xlu0 %546
    %548 = vrot.lane.b32.xlu0 %v510, 1
    %v549 = vpop.permute.xlu0 %548
    %550 = vrot.lane.b32.xlu0 %v375, 1
    %v551 = vpop.permute.xlu0 %550
    %552 = vrot.lane.b32.xlu0 %v511, 1
    %v553 = vpop.permute.xlu0 %552
    %554 = vrot.lane.b32.xlu0 %v376, 1
    %v555 = vpop.permute.xlu0 %554
    %556 = vrot.lane.b32.xlu0 %v512, 1
    %v557 = vpop.permute.xlu0 %556
    %558 = vrot.lane.b32.xlu0 %v377, 1
    %v559 = vpop.permute.xlu0 %558
    %560 = vrot.lane.b32.xlu0 %v513, 1
    %v561 = vpop.permute.xlu0 %560
    %vm578 = vcmask 138248
    %579 = vst.msk [vmem:[%s4 + $0x1] sm:$0xff] %vm578, %v531
    %580 = vst.msk [vmem:[%s4 + $0x9] sm:$0xff] %vm578, %v533
    %581 = vst.msk [vmem:[%s4 + $0x19] sm:$0xff] %vm578, %v535
    %582 = vst.msk [vmem:[%s4 + $0x21] sm:$0xff] %vm578, %v537
    %583 = vst.msk [vmem:[%s4 + $0x31] sm:$0xff] %vm578, %v539
    %584 = vst.msk [vmem:[%s4 + $0x39] sm:$0xff] %vm578, %v541
    %585 = vst.msk [vmem:[%s4 + $0x49] sm:$0xff] %vm578, %v543
    %586 = vst.msk [vmem:[%s4 + $0x51] sm:$0xff] %vm578, %v545
    %587 = vst.msk [vmem:[%s4 + $0x61] sm:$0xff] %vm578, %v547
    %588 = vst.msk [vmem:[%s4 + $0x69] sm:$0xff] %vm578, %v549
    %589 = vst.msk [vmem:[%s4 + $0x79] sm:$0xff] %vm578, %v551
    %590 = vst.msk [vmem:[%s4 + $0x81] sm:$0xff] %vm578, %v553
    %591 = vst.msk [vmem:[%s4 + $0x91] sm:$0xff] %vm578, %v555
    %592 = vst.msk [vmem:[%s4 + $0x99] sm:$0xff] %vm578, %v557
    %593 = vst.msk [vmem:[%s4 + $0xa9] sm:$0xff] %vm578, %v559
    %594 = vst.msk [vmem:[%s4 + $0xb1] sm:$0xff] %vm578, %v561
    %v595 = vld [vmem:[%s0] sm:$0xff]
    %s596 = scalar_lea.vmem %s3, 48
    %v597 = vld [vmem:[%s596] sm:$0xff]
    %v598 = vld [vmem:[%s596 + $0x8] sm:$0xff]
    %v599 = vld [vmem:[%s596 + $0x10] sm:$0xff]
    %v600 = vld [vmem:[%s596 + $0x18] sm:$0xff]
    %v601 = vld [vmem:[%s596 + $0x20] sm:$0x7f]
    %v602 = vld [vmem:[%s596 + $0x28] sm:$0x7f]
    %v604 = vsel %vm116, %v595, 0
    %v607 = vsel %vm120, %v601, 0
    %v610 = vsel %vm120, %v602, 0
    %612 = vmatprep.subr.mxu0 0.0
    %613 = vmatpush1.msra.mxu0 0.0
    %614 = vmatprep.subr.mxu0 0.0
    %615 = vmatpush1.msra.mxu0 0.0
    %616 = vmatprep.subr.mxu0 0.0
    %617 = vmatpush1.msra.mxu0 0.0
    %618 = vmatprep.subr.mxu0 0.0
    %619 = vmatpush1.msra.mxu0 0.0
    %620 = vmatprep.subr.mxu0 0.0
    %621 = vmatpush1.msra.mxu0 0.0
    %622 = vmatprep.subr.mxu0 0.0
    %623 = vmatpush1.msra.mxu0 0.0
    %624 = vmatprep.subr.mxu0 0.0
    %625 = vmatpush1.msra.mxu0 0.0
    %626 = vmatprep.subr.mxu0 0.0
    %627 = vmatpush1.msra.mxu0 0.0
    %628 = vmatprep.subr.mxu0 0.0
    %629 = vmatpush1.msra.mxu0 0.0
    %630 = vmatprep.subr.mxu0 0.0
    %631 = vmatpush1.msra.mxu0 0.0
    %632 = vmatprep.subr.mxu0 0.0
    %633 = vmatpush1.msra.mxu0 0.0
    %634 = vmatprep.subr.mxu0 0.0
    %635 = vmatpush1.msra.mxu0 0.0
    %636 = vmatprep.subr.mxu0 0.0
    %637 = vmatpush1.msra.mxu0 0.0
    %638 = vmatprep.subr.mxu0 %v610
    %639 = vmatpush1.msra.mxu0 %v607
    %640 = vmatprep.subr.mxu0 %v600
    %641 = vmatpush1.msra.mxu0 %v599
    %642 = vmatprep.subr.mxu0 %v598
    %643 = vmatpush1.msra.mxu0 %v597
    %644 = vmatprep.subr.mxu0 0.0
    %645 = vmatpush2.msra.mxu0 0.0
    %646 = vmatprep.subr.mxu0 0.0
    %647 = vmatpush2.msra.mxu0 0.0
    %648 = vmatprep.subr.mxu0 0.0
    %649 = vmatpush2.msra.mxu0 0.0
    %650 = vmatprep.subr.mxu0 0.0
    %651 = vmatpush2.msra.mxu0 0.0
    %652 = vmatprep.subr.mxu0 0.0
    %653 = vmatpush2.msra.mxu0 0.0
    %654 = vmatprep.subr.mxu0 0.0
    %655 = vmatpush2.msra.mxu0 0.0
    %656 = vmatprep.subr.mxu0 0.0
    %657 = vmatpush2.msra.mxu0 0.0
    %658 = vmatprep.subr.mxu0 0.0
    %659 = vmatpush2.msra.mxu0 0.0
    %660 = vmatprep.subr.mxu0 0.0
    %661 = vmatpush2.msra.mxu0 0.0
    %662 = vmatprep.subr.mxu0 0.0
    %663 = vmatpush2.msra.mxu0 0.0
    %664 = vmatprep.subr.mxu0 0.0
    %665 = vmatpush2.msra.mxu0 0.0
    %666 = vmatprep.subr.mxu0 0.0
    %667 = vmatpush2.msra.mxu0 0.0
    %668 = vmatprep.subr.mxu0 0.0
    %669 = vmatpush2.msra.mxu0 0.0
    %670 = vmatprep.subr.mxu0 0.0
    %671 = vmatpush2.msra.mxu0 0.0
    %672 = vmatprep.subr.mxu0 0.0
    %673 = vmatpush2.msra.mxu0 0.0
    %674 = vmatprep.subr.mxu0 0.0
    %675 = vmatpush2.msra.mxu0 0.0
    %676 = vmatprep.mubr.f32.mxu0 0.0
    %677 = vmatmul.mubr.f32.gmra.mxu0 %v604
    %v678 = vpop.f32.mrf.mxu0
    %v679 = vadd.f32 %v114, %v678
    %v680 = vpop.f32.mrf.mxu0
    %v681 = vadd.f32 %v114, %v680
    %682 = vdwg.mxu0
    %684 = vrot.lane.b32.xlu0 %v679, 112
    %v685 = vpop.permute.xlu0 %684
    %687 = vrot.lane.b32.xlu0 %v679, 96
    %v688 = vpop.permute.xlu0 %687
    %690 = vrot.lane.b32.xlu0 %v679, 80
    %v691 = vpop.permute.xlu0 %690
    %693 = vrot.lane.b32.xlu0 %v679, 64
    %v694 = vpop.permute.xlu0 %693
    %696 = vrot.lane.b32.xlu0 %v679, 48
    %v697 = vpop.permute.xlu0 %696
    %699 = vrot.lane.b32.xlu0 %v679, 32
    %v700 = vpop.permute.xlu0 %699
    %702 = vrot.lane.b32.xlu0 %v679, 16
    %v703 = vpop.permute.xlu0 %702
    %706 = vrot.lane.b32.xlu0 %v681, 112
    %v707 = vpop.permute.xlu0 %706
    %709 = vrot.lane.b32.xlu0 %v681, 96
    %v710 = vpop.permute.xlu0 %709
    %712 = vrot.lane.b32.xlu0 %v681, 80
    %v713 = vpop.permute.xlu0 %712
    %715 = vrot.lane.b32.xlu0 %v681, 64
    %v716 = vpop.permute.xlu0 %715
    %718 = vrot.lane.b32.xlu0 %v681, 48
    %v719 = vpop.permute.xlu0 %718
    %721 = vrot.lane.b32.xlu0 %v681, 32
    %v722 = vpop.permute.xlu0 %721
    %724 = vrot.lane.b32.xlu0 %v681, 16
    %v725 = vpop.permute.xlu0 %724
    %v727 = vcombine.low %v679, %v688
    %v728 = vcombine.high %v679, %v688
    %v730 = vunpack.c.l.s4 1983009808
    %v731 = vunpack.c.0.s8 %v730
    %v732 = vlaneseq
    %v733 = vshrl.u32 %v732, 7
    %v734 = vsub.s32 %v731, %v733
    %v735 = vrot.slane %v727, %v734
    %v737 = vunpack.c.l.s4 1983009808
    %v738 = vunpack.c.0.s8 %v737
    %v739 = vlaneseq
    %v740 = vshrl.u32 %v739, 7
    %v741 = vsub.s32 %v738, %v740
    %v742 = vrot.slane %v728, %v741
    %v743 = vcombine.low %v685, %v691
    %v744 = vcombine.high %v685, %v691
    %v746 = vunpack.c.l.s4 1983009808
    %v747 = vunpack.c.0.s8 %v746
    %v748 = vlaneseq
    %v749 = vshrl.u32 %v748, 7
    %v750 = vsub.s32 %v747, %v749
    %v751 = vrot.slane %v743, %v750
    %v753 = vunpack.c.l.s4 1983009808
    %v754 = vunpack.c.0.s8 %v753
    %v755 = vlaneseq
    %v756 = vshrl.u32 %v755, 7
    %v757 = vsub.s32 %v754, %v756
    %v758 = vrot.slane %v744, %v757
    %v759 = vcombine.low %v694, %v700
    %v760 = vcombine.high %v694, %v700
    %v762 = vunpack.c.l.s4 1983009808
    %v763 = vunpack.c.0.s8 %v762
    %v764 = vlaneseq
    %v765 = vshrl.u32 %v764, 7
    %v766 = vsub.s32 %v763, %v765
    %v767 = vrot.slane %v759, %v766
    %v769 = vunpack.c.l.s4 1983009808
    %v770 = vunpack.c.0.s8 %v769
    %v771 = vlaneseq
    %v772 = vshrl.u32 %v771, 7
    %v773 = vsub.s32 %v770, %v772
    %v774 = vrot.slane %v760, %v773
    %v775 = vcombine.low %v697, %v703
    %v776 = vcombine.high %v697, %v703
    %v778 = vunpack.c.l.s4 1983009808
    %v779 = vunpack.c.0.s8 %v778
    %v780 = vlaneseq
    %v781 = vshrl.u32 %v780, 7
    %v782 = vsub.s32 %v779, %v781
    %v783 = vrot.slane %v775, %v782
    %v785 = vunpack.c.l.s4 1983009808
    %v786 = vunpack.c.0.s8 %v785
    %v787 = vlaneseq
    %v788 = vshrl.u32 %v787, 7
    %v789 = vsub.s32 %v786, %v788
    %v790 = vrot.slane %v776, %v789
    %v791 = vcombine.low %v735, %v751
    %v792 = vcombine.high %v735, %v751
    %v794 = vunpack.c.l.s4 1934713408
    %v795 = vunpack.c.0.s8 %v794
    %v796 = vlaneseq
    %v797 = vshrl.u32 %v796, 7
    %v798 = vsub.s32 %v795, %v797
    %v799 = vrot.slane %v791, %v798
    %v801 = vunpack.c.l.s4 1934713408
    %v802 = vunpack.c.0.s8 %v801
    %v803 = vlaneseq
    %v804 = vshrl.u32 %v803, 7
    %v805 = vsub.s32 %v802, %v804
    %v806 = vrot.slane %v792, %v805
    %v807 = vcombine.low %v742, %v758
    %v808 = vcombine.high %v742, %v758
    %v810 = vunpack.c.l.s4 1934713408
    %v811 = vunpack.c.0.s8 %v810
    %v812 = vlaneseq
    %v813 = vshrl.u32 %v812, 7
    %v814 = vsub.s32 %v811, %v813
    %v815 = vrot.slane %v807, %v814
    %v817 = vunpack.c.l.s4 1934713408
    %v818 = vunpack.c.0.s8 %v817
    %v819 = vlaneseq
    %v820 = vshrl.u32 %v819, 7
    %v821 = vsub.s32 %v818, %v820
    %v822 = vrot.slane %v808, %v821
    %v823 = vcombine.low %v767, %v783
    %v824 = vcombine.high %v767, %v783
    %v826 = vunpack.c.l.s4 1934713408
    %v827 = vunpack.c.0.s8 %v826
    %v828 = vlaneseq
    %v829 = vshrl.u32 %v828, 7
    %v830 = vsub.s32 %v827, %v829
    %v831 = vrot.slane %v823, %v830
    %v833 = vunpack.c.l.s4 1934713408
    %v834 = vunpack.c.0.s8 %v833
    %v835 = vlaneseq
    %v836 = vshrl.u32 %v835, 7
    %v837 = vsub.s32 %v834, %v836
    %v838 = vrot.slane %v824, %v837
    %v839 = vcombine.low %v774, %v790
    %v840 = vcombine.high %v774, %v790
    %v842 = vunpack.c.l.s4 1934713408
    %v843 = vunpack.c.0.s8 %v842
    %v844 = vlaneseq
    %v845 = vshrl.u32 %v844, 7
    %v846 = vsub.s32 %v843, %v845
    %v847 = vrot.slane %v839, %v846
    %v849 = vunpack.c.l.s4 1934713408
    %v850 = vunpack.c.0.s8 %v849
    %v851 = vlaneseq
    %v852 = vshrl.u32 %v851, 7
    %v853 = vsub.s32 %v850, %v852
    %v854 = vrot.slane %v840, %v853
    %v855 = vcombine.low %v799, %v831
    %v856 = vcombine.high %v799, %v831
    %v857 = vcombine.low %v806, %v838
    %v858 = vcombine.high %v806, %v838
    %v859 = vcombine.low %v815, %v847
    %v860 = vcombine.high %v815, %v847
    %v861 = vcombine.low %v822, %v854
    %v862 = vcombine.high %v822, %v854
    %v863 = vcombine.low %v681, %v710
    %v864 = vcombine.high %v681, %v710
    %v866 = vunpack.c.l.s4 1983009808
    %v867 = vunpack.c.0.s8 %v866
    %v868 = vlaneseq
    %v869 = vshrl.u32 %v868, 7
    %v870 = vsub.s32 %v867, %v869
    %v871 = vrot.slane %v863, %v870
    %v873 = vunpack.c.l.s4 1983009808
    %v874 = vunpack.c.0.s8 %v873
    %v875 = vlaneseq
    %v876 = vshrl.u32 %v875, 7
    %v877 = vsub.s32 %v874, %v876
    %v878 = vrot.slane %v864, %v877
    %v879 = vcombine.low %v707, %v713
    %v880 = vcombine.high %v707, %v713
    %v882 = vunpack.c.l.s4 1983009808
    %v883 = vunpack.c.0.s8 %v882
    %v884 = vlaneseq
    %v885 = vshrl.u32 %v884, 7
    %v886 = vsub.s32 %v883, %v885
    %v887 = vrot.slane %v879, %v886
    %v889 = vunpack.c.l.s4 1983009808
    %v890 = vunpack.c.0.s8 %v889
    %v891 = vlaneseq
    %v892 = vshrl.u32 %v891, 7
    %v893 = vsub.s32 %v890, %v892
    %v894 = vrot.slane %v880, %v893
    %v895 = vcombine.low %v716, %v722
    %v896 = vcombine.high %v716, %v722
    %v898 = vunpack.c.l.s4 1983009808
    %v899 = vunpack.c.0.s8 %v898
    %v900 = vlaneseq
    %v901 = vshrl.u32 %v900, 7
    %v902 = vsub.s32 %v899, %v901
    %v903 = vrot.slane %v895, %v902
    %v905 = vunpack.c.l.s4 1983009808
    %v906 = vunpack.c.0.s8 %v905
    %v907 = vlaneseq
    %v908 = vshrl.u32 %v907, 7
    %v909 = vsub.s32 %v906, %v908
    %v910 = vrot.slane %v896, %v909
    %v911 = vcombine.low %v719, %v725
    %v912 = vcombine.high %v719, %v725
    %v914 = vunpack.c.l.s4 1983009808
    %v915 = vunpack.c.0.s8 %v914
    %v916 = vlaneseq
    %v917 = vshrl.u32 %v916, 7
    %v918 = vsub.s32 %v915, %v917
    %v919 = vrot.slane %v911, %v918
    %v921 = vunpack.c.l.s4 1983009808
    %v922 = vunpack.c.0.s8 %v921
    %v923 = vlaneseq
    %v924 = vshrl.u32 %v923, 7
    %v925 = vsub.s32 %v922, %v924
    %v926 = vrot.slane %v912, %v925
    %v927 = vcombine.low %v871, %v887
    %v928 = vcombine.high %v871, %v887
    %v930 = vunpack.c.l.s4 1934713408
    %v931 = vunpack.c.0.s8 %v930
    %v932 = vlaneseq
    %v933 = vshrl.u32 %v932, 7
    %v934 = vsub.s32 %v931, %v933
    %v935 = vrot.slane %v927, %v934
    %v937 = vunpack.c.l.s4 1934713408
    %v938 = vunpack.c.0.s8 %v937
    %v939 = vlaneseq
    %v940 = vshrl.u32 %v939, 7
    %v941 = vsub.s32 %v938, %v940
    %v942 = vrot.slane %v928, %v941
    %v943 = vcombine.low %v878, %v894
    %v944 = vcombine.high %v878, %v894
    %v946 = vunpack.c.l.s4 1934713408
    %v947 = vunpack.c.0.s8 %v946
    %v948 = vlaneseq
    %v949 = vshrl.u32 %v948, 7
    %v950 = vsub.s32 %v947, %v949
    %v951 = vrot.slane %v943, %v950
    %v953 = vunpack.c.l.s4 1934713408
    %v954 = vunpack.c.0.s8 %v953
    %v955 = vlaneseq
    %v956 = vshrl.u32 %v955, 7
    %v957 = vsub.s32 %v954, %v956
    %v958 = vrot.slane %v944, %v957
    %v959 = vcombine.low %v903, %v919
    %v960 = vcombine.high %v903, %v919
    %v962 = vunpack.c.l.s4 1934713408
    %v963 = vunpack.c.0.s8 %v962
    %v964 = vlaneseq
    %v965 = vshrl.u32 %v964, 7
    %v966 = vsub.s32 %v963, %v965
    %v967 = vrot.slane %v959, %v966
    %v969 = vunpack.c.l.s4 1934713408
    %v970 = vunpack.c.0.s8 %v969
    %v971 = vlaneseq
    %v972 = vshrl.u32 %v971, 7
    %v973 = vsub.s32 %v970, %v972
    %v974 = vrot.slane %v960, %v973
    %v975 = vcombine.low %v910, %v926
    %v976 = vcombine.high %v910, %v926
    %v978 = vunpack.c.l.s4 1934713408
    %v979 = vunpack.c.0.s8 %v978
    %v980 = vlaneseq
    %v981 = vshrl.u32 %v980, 7
    %v982 = vsub.s32 %v979, %v981
    %v983 = vrot.slane %v975, %v982
    %v985 = vunpack.c.l.s4 1934713408
    %v986 = vunpack.c.0.s8 %v985
    %v987 = vlaneseq
    %v988 = vshrl.u32 %v987, 7
    %v989 = vsub.s32 %v986, %v988
    %v990 = vrot.slane %v976, %v989
    %v991 = vcombine.low %v935, %v967
    %v992 = vcombine.high %v935, %v967
    %v993 = vcombine.low %v942, %v974
    %v994 = vcombine.high %v942, %v974
    %v995 = vcombine.low %v951, %v983
    %v996 = vcombine.high %v951, %v983
    %v997 = vcombine.low %v958, %v990
    %v998 = vcombine.high %v958, %v990
    %1015 = vrot.lane.b32.xlu0 %v855, 1
    %v1016 = vpop.permute.xlu0 %1015
    %1017 = vrot.lane.b32.xlu0 %v991, 1
    %v1018 = vpop.permute.xlu0 %1017
    %1019 = vrot.lane.b32.xlu0 %v856, 1
    %v1020 = vpop.permute.xlu0 %1019
    %1021 = vrot.lane.b32.xlu0 %v992, 1
    %v1022 = vpop.permute.xlu0 %1021
    %1023 = vrot.lane.b32.xlu0 %v857, 1
    %v1024 = vpop.permute.xlu0 %1023
    %1025 = vrot.lane.b32.xlu0 %v993, 1
    %v1026 = vpop.permute.xlu0 %1025
    %1027 = vrot.lane.b32.xlu0 %v858, 1
    %v1028 = vpop.permute.xlu0 %1027
    %1029 = vrot.lane.b32.xlu0 %v994, 1
    %v1030 = vpop.permute.xlu0 %1029
    %1031 = vrot.lane.b32.xlu0 %v859, 1
    %v1032 = vpop.permute.xlu0 %1031
    %1033 = vrot.lane.b32.xlu0 %v995, 1
    %v1034 = vpop.permute.xlu0 %1033
    %1035 = vrot.lane.b32.xlu0 %v860, 1
    %v1036 = vpop.permute.xlu0 %1035
    %1037 = vrot.lane.b32.xlu0 %v996, 1
    %v1038 = vpop.permute.xlu0 %1037
    %1039 = vrot.lane.b32.xlu0 %v861, 1
    %v1040 = vpop.permute.xlu0 %1039
    %1041 = vrot.lane.b32.xlu0 %v997, 1
    %v1042 = vpop.permute.xlu0 %1041
    %1043 = vrot.lane.b32.xlu0 %v862, 1
    %v1044 = vpop.permute.xlu0 %1043
    %1045 = vrot.lane.b32.xlu0 %v998, 1
    %v1046 = vpop.permute.xlu0 %1045
    %s1063 = scalar_lea.vmem %s4, 192
    %1064 = vst.msk [vmem:[%s1063 + $0x1] sm:$0xff] %vm578, %v1016
    %1065 = vst.msk [vmem:[%s1063 + $0x9] sm:$0xff] %vm578, %v1018
    %1066 = vst.msk [vmem:[%s1063 + $0x19] sm:$0xff] %vm578, %v1020
    %1067 = vst.msk [vmem:[%s1063 + $0x21] sm:$0xff] %vm578, %v1022
    %1068 = vst.msk [vmem:[%s1063 + $0x31] sm:$0xff] %vm578, %v1024
    %1069 = vst.msk [vmem:[%s1063 + $0x39] sm:$0xff] %vm578, %v1026
    %1070 = vst.msk [vmem:[%s1063 + $0x49] sm:$0xff] %vm578, %v1028
    %1071 = vst.msk [vmem:[%s1063 + $0x51] sm:$0xff] %vm578, %v1030
    %1072 = vst.msk [vmem:[%s1063 + $0x61] sm:$0xff] %vm578, %v1032
    %1073 = vst.msk [vmem:[%s1063 + $0x69] sm:$0xff] %vm578, %v1034
    %1074 = vst.msk [vmem:[%s1063 + $0x79] sm:$0xff] %vm578, %v1036
    %1075 = vst.msk [vmem:[%s1063 + $0x81] sm:$0xff] %vm578, %v1038
    %1076 = vst.msk [vmem:[%s1063 + $0x91] sm:$0xff] %vm578, %v1040
    %1077 = vst.msk [vmem:[%s1063 + $0x99] sm:$0xff] %vm578, %v1042
    %1078 = vst.msk [vmem:[%s1063 + $0xa9] sm:$0xff] %vm578, %v1044
    %1079 = vst.msk [vmem:[%s1063 + $0xb1] sm:$0xff] %vm578, %v1046
    // Predicated region
    $region22: #{conv2d_1x1_pad1.1} parent=1 // pred_check
      _
    $region23: #{conv2d_1x1_pad1.1} parent=1 // pred_check_branch
      %1081 = sbr.rel (0) target = $region25
    $region24: #{conv2d_1x1_pad1.1} parent=1 // pred_region
      _
    $region25: #{conv2d_1x1_pad1.1} parent=1 // pred_fallthru
      _
    // Predicated region
    $region26: #{conv2d_1x1_pad1.1} parent=1 // pred_check
      _
    $region27: #{conv2d_1x1_pad1.1} parent=1 // pred_check_branch
      %1083 = sbr.rel (0) target = $region29
    $region28: #{conv2d_1x1_pad1.1} parent=1 // pred_region
      _
    $region29: #{conv2d_1x1_pad1.1} parent=1 // pred_fallthru
      _
    %1084 = vsyncpa [#allocation3], 1

</llo_original>
